<compile_context>
chip_gen: v7x
topology: tpu7x:2x2x1
jax: 0.10.0
libtpu: 0.0.40
codegen_flags: <defaults>
</compile_context>

<pallas_src>
import functools

import numpy as np
import jax
import jax.numpy as jnp
from jax.experimental import pallas as pl
from jax.experimental.pallas import tpu as pltpu

POSITIVE_AU_PAIRS = [(0, 1), (2, 5), (2, 6), (5, 6), (4, 8),
                     (6, 11), (9, 11), (9, 14), (11, 14), (13, 14)]
NEGATIVE_AU_PAIRS = [(1, 4), (1, 5), (8, 9), (8, 11)]

_MiB = 1024 * 1024


def _round_up(x, m):
    return ((x + m - 1) // m) * m


def _bf16_vpu():
    """True on generations with a bf16-capable VPU (v6e / v7x)."""
    try:
        kind = jax.devices()[0].device_kind.lower()
    except Exception:
        return False
    return any(tag in kind for tag in ("v6", "v7", "tpu7"))


def _pick_tiling(b, c, itemsize, tile_b):
    """Batch tile + scoped-VMEM limit sized from this generation's VMEM."""
    try:
        vmem_cap = int(pltpu.get_tpu_info().vmem_capacity_bytes)
    except Exception:
        vmem_cap = 64 * _MiB                      # conservative (v7x-sized) fallback
    # 48 MiB on v7x (64 MiB physical), 96 MiB on v5e/v6e (128 MiB physical).
    vmem_limit = min(vmem_cap * 3 // 4, 96 * _MiB)

    # VMEM bytes per pred row after lane padding to the (8,128) tiling.
    row_bytes = _round_up(max(c, 1), 128) * itemsize

    if tile_b is None:
        budget = vmem_limit - 6 * _MiB            # accumulators, ones row, e, headroom
        tile_cap = 32768 if itemsize <= 2 else 16384
        tile_b = min(tile_cap, max(8, (budget // (2 * row_bytes)) // 8 * 8))
    tile_b = int(max(8, _round_up(min(int(tile_b), _round_up(b, 8)), 8)))
    return tile_b, int(vmem_limit)


def _au_loss_kernel(pred_ref, e_ref, out_ref, acc_g, acc_sp, acc_sx, ones_ref,
                    *, total_b, tile_b, n_pairs, n_pos, cast_to_f32):
    step = pl.program_id(0)
    nsteps = pl.num_programs(0)
    inv_b = 1.0 / total_b

    @pl.when(step == 0)
    def _init():
        acc_g[...] = jnp.zeros_like(acc_g)
        acc_sp[...] = jnp.zeros_like(acc_sp)
        acc_sx[...] = jnp.zeros_like(acc_sx)
        ones_ref[...] = jnp.ones_like(ones_ref)   # ones row for MXU column sums

    x = pred_ref[...]                             # (tile_b, C), input dtype
    if cast_to_f32:                               # static: only on non-bf16 VPUs
        x = x.astype(jnp.float32)

    def accumulate(xm):
        xp = jnp.where(xm >= 0.5, xm, 0.0)        # x * [x >= 0.5]
        ones = ones_ref[...]                      # (1, tile_b), resident scratch
        # All batch contractions run on the MXU (tiny outputs), f32 accumulation.
        acc_g[...] += jax.lax.dot_general(
            xp, xp, (((0,), (0,)), ((), ())),
            preferred_element_type=jnp.float32)                        # (C, C)
        acc_sp[...] += jnp.dot(ones, xp, preferred_element_type=jnp.float32)  # (1, C)
        acc_sx[...] += jnp.dot(ones, xm, preferred_element_type=jnp.float32)  # (1, C)

    if total_b % tile_b == 0:
        accumulate(x)                             # no masking work at all
    else:
        @pl.when(step < nsteps - 1)
        def _steady():
            accumulate(x)

        @pl.when(step == nsteps - 1)
        def _tail():                              # masked partial last tile
            remaining = total_b - step * tile_b
            row_ok = jax.lax.broadcasted_iota(jnp.int32, (tile_b, 1), 0) < remaining
            accumulate(jnp.where(row_ok, x, 0.0))

    @pl.when(step == nsteps - 1)
    def _finalize():
        e = e_ref[...]                            # (C, 2P): [:, :P]=ei, [:, P:]=ej
        p = n_pairs

        s_pos = acc_sp[...] * inv_b               # (1, C) pos_prob per channel
        s_neg = (acc_sx[...] - acc_sp[...]) * inv_b  # (1, C) neg_prob per channel

        # Gather pair columns via tiny one-hot matmuls.
        sp_e = jnp.dot(s_pos, e, preferred_element_type=jnp.float32)   # (1, 2P)
        sn_e = jnp.dot(s_neg, e, preferred_element_type=jnp.float32)   # (1, 2P)
        ge = jnp.dot(acc_g[...] * inv_b, e,
                     preferred_element_type=jnp.float32)                # (C, 2P)

        pos_i, pos_j = sp_e[:, :p], sp_e[:, p:]
        neg_i, neg_j = sn_e[:, :p], sn_e[:, p:]
        pp = jnp.sum(e[:, :p] * ge[:, p:], axis=0, keepdims=True)       # (1, P)

        sign = jnp.where(
            jax.lax.broadcasted_iota(jnp.int32, (1, p), 1) < n_pos, 1.0, -1.0)

        relu = lambda v: jnp.maximum(v, 0.0)
        t1 = relu(pos_i * pos_j - pp)             # same term for both pair kinds
        t2 = relu(sign * (neg_i * pos_j - pp))
        t3 = relu(sign * (pos_i * neg_j - pp))
        out_ref[...] = jnp.sum(t1 + t2 + t3, axis=1, keepdims=True)     # (1, 1)


def expression_independent_au_loss(pred, target=None, size_average=True, tile_b=None):
    """pred: (B, C) float array (f32 or bf16), C >= 15.  `target` is unused."""
    pred = jnp.asarray(pred)
    compute_in_bf16 = (pred.dtype == jnp.dtype(jnp.bfloat16)) and _bf16_vpu()
    if pred.dtype not in (jnp.dtype(jnp.bfloat16), jnp.dtype(jnp.float32)):
        pred = pred.astype(jnp.float32)
    compute_dtype = jnp.bfloat16 if compute_in_bf16 else jnp.float32
    cast_to_f32 = pred.dtype != jnp.dtype(compute_dtype)

    b, c = pred.shape
    pairs = POSITIVE_AU_PAIRS + NEGATIVE_AU_PAIRS
    p = len(pairs)

    # Fused one-hot pair-gather constant: columns [0:P] select i, [P:2P] select j.
    e = np.zeros((c, 2 * p), np.float32)
    for k, (i, j) in enumerate(pairs):
        e[i, k] = 1.0
        e[j, p + k] = 1.0

    tile_b, vmem_limit = _pick_tiling(b, c, pred.dtype.itemsize, tile_b)
    grid = (pl.cdiv(b, tile_b),)

    kernel = functools.partial(
        _au_loss_kernel,
        total_b=b, tile_b=tile_b, n_pairs=p, n_pos=len(POSITIVE_AU_PAIRS),
        cast_to_f32=cast_to_f32)

    out = pl.pallas_call(
        kernel,
        out_shape=jax.ShapeDtypeStruct((1, 1), jnp.float32),
        grid_spec=pltpu.PrefetchScalarGridSpec(
            num_scalar_prefetch=0,
            grid=grid,
            in_specs=[
                pl.BlockSpec((tile_b, c), lambda s: (s, 0)),     # pred batch tile
                pl.BlockSpec((c, 2 * p), lambda s: (0, 0)),      # pair one-hots (resident)
            ],
            out_specs=pl.BlockSpec((1, 1), lambda s: (0, 0)),
            scratch_shapes=[
                pltpu.VMEM((c, c), jnp.float32),                 # Gram accumulator
                pltpu.VMEM((1, c), jnp.float32),                 # sum of x*[x>=0.5]
                pltpu.VMEM((1, c), jnp.float32),                 # sum of x
                pltpu.VMEM((1, tile_b), compute_dtype),          # ones row (MXU sums)
            ],
        ),
        compiler_params=pltpu.CompilerParams(
            dimension_semantics=("arbitrary",),                  # batch = reduction axis
            vmem_limit_bytes=vmem_limit,
        ),
        cost_estimate=pl.CostEstimate(
            flops=2 * b * c * (c + 2),
            transcendentals=0,
            bytes_accessed=b * c * pred.dtype.itemsize + c * 2 * p * 4 + 4,
        ),
    )(pred, jnp.asarray(e))

    loss = out[0, 0]
    if size_average:
        return loss               # mean of a length-1 tensor == the value itself
    return loss.reshape(1)


def _reference_numpy(pred):
    pred = np.asarray(pred, np.float64)
    bsz = pred.shape[0]

    def pos_prob(i):
        m = pred[:, i] >= 0.5
        return float(np.sum(pred[:, i] * m)) / bsz

    def neg_prob(i):
        m = pred[:, i] < 0.5
        return float(np.sum(pred[:, i] * m)) / bsz

    def pos_pos_prob(i, j):
        m = (pred[:, i] >= 0.5) & (pred[:, j] >= 0.5)
        return float(np.sum(pred[:, i] * pred[:, j] * m)) / bsz

    relu = lambda v: max(v, 0.0)
    loss = 0.0
    for i, j in POSITIVE_AU_PAIRS:
        loss += (relu(pos_prob(i) * pos_prob(j) - pos_pos_prob(i, j))
                 + relu(neg_prob(i) * pos_prob(j) - pos_pos_prob(i, j))
                 + relu(pos_prob(i) * neg_prob(j) - pos_pos_prob(i, j)))
    for i, j in NEGATIVE_AU_PAIRS:
        loss += (relu(pos_prob(i) * pos_prob(j) - pos_pos_prob(i, j))
                 + relu(pos_pos_prob(i, j) - neg_prob(i) * pos_prob(j))
                 + relu(pos_pos_prob(i, j) - pos_prob(i) * neg_prob(j)))
    return loss


if __name__ == "__main__":
    key = jax.random.PRNGKey(0)
    B, C = 20, 16   # AU indices go up to 14 -> need >= 15 channels
    pred = jax.random.uniform(key, (B, C), dtype=jnp.float32)     # probabilities in [0, 1)
    target = jnp.zeros((B, C), jnp.float32)                       # unused by the loss

    ref = _reference_numpy(np.asarray(pred))

    # tile_b=8 -> 3-step batch grid with a masked partial last tile (exercises
    # multi-step accumulation, the steady/tail split and the MXU column sums).
    loss_small = expression_independent_au_loss(pred, target, size_average=True, tile_b=8)
    loss_small = jax.block_until_ready(loss_small)
    np.testing.assert_allclose(np.asarray(loss_small), ref, rtol=1e-4, atol=1e-5)

    # Default auto-tiled path (single step here; large tiles on big batches).
    loss_auto = expression_independent_au_loss(pred, target, size_average=True)
    loss_auto = jax.block_until_ready(loss_auto)
    np.testing.assert_allclose(np.asarray(loss_auto), ref, rtol=1e-4, atol=1e-5)

    print("KERNEL_OK")
</pallas_src>

<mosaic_0001>
module attributes {stable_mosaic.version = 11 : i64} {
  func.func @_au_loss_kernel(%arg0: i32, %arg1: memref<8x16xf32, #tpu.memory_space<vmem>>, %arg2: memref<16x28xf32, #tpu.memory_space<vmem>>, %arg3: memref<1x1xf32, #tpu.memory_space<vmem>>, %arg4: memref<16x16xf32, #tpu.memory_space<vmem>>, %arg5: memref<1x16xf32, #tpu.memory_space<vmem>>, %arg6: memref<1x16xf32, #tpu.memory_space<vmem>>, %arg7: memref<1x8xf32, #tpu.memory_space<vmem>>) attributes {dimension_semantics = [#tpu.dimension_semantics<arbitrary>], iteration_bounds = array<i64: 3>, scalar_prefetch = 0 : i64, scratch_operands = 4 : i64, tpu.core_type = #tpu.core_type<tc>, window_params = [{transform_indices = @transform_0, window_bounds = array<i64: 8, 16>}, {pipeline_mode = #tpu.pipeline_mode<synchronous>, transform_indices = @transform_1, window_bounds = array<i64: 16, 28>}, {pipeline_mode = #tpu.pipeline_mode<synchronous>, transform_indices = @transform_2, window_bounds = array<i64: 1, 1>}]} {
    %c0_i32 = arith.constant 0 : i32
    %0 = arith.cmpi eq, %arg0, %c0_i32 : i32
    %1 = arith.extui %0 : i1 to i32
    %c0_i32_0 = arith.constant 0 : i32
    %2 = arith.cmpi ne, %1, %c0_i32_0 : i32
    scf.if %2 {
      %cst = arith.constant 0.000000e+00 : f32
      %13 = vector.broadcast %cst : f32 to vector<16x16xf32>
      %c0_7 = arith.constant 0 : index
      %c0_8 = arith.constant 0 : index
      %14 = vector.load %arg4[%c0_7, %c0_8] : memref<16x16xf32, #tpu.memory_space<vmem>>, vector<16x16xf32>
      tpu.vector_store %arg4[%c0_7, %c0_8], %13 {strides = array<i32>} : memref<16x16xf32, #tpu.memory_space<vmem>>, vector<16x16xf32>,
      %cst_9 = arith.constant 0.000000e+00 : f32
      %15 = vector.broadcast %cst_9 : f32 to vector<1x16xf32>
      %c0_10 = arith.constant 0 : index
      %c0_11 = arith.constant 0 : index
      %16 = vector.load %arg5[%c0_10, %c0_11] : memref<1x16xf32, #tpu.memory_space<vmem>>, vector<1x16xf32>
      tpu.vector_store %arg5[%c0_10, %c0_11], %15 {strides = array<i32>} : memref<1x16xf32, #tpu.memory_space<vmem>>, vector<1x16xf32>,
      %cst_12 = arith.constant 0.000000e+00 : f32
      %17 = vector.broadcast %cst_12 : f32 to vector<1x16xf32>
      %c0_13 = arith.constant 0 : index
      %c0_14 = arith.constant 0 : index
      %18 = vector.load %arg6[%c0_13, %c0_14] : memref<1x16xf32, #tpu.memory_space<vmem>>, vector<1x16xf32>
      tpu.vector_store %arg6[%c0_13, %c0_14], %17 {strides = array<i32>} : memref<1x16xf32, #tpu.memory_space<vmem>>, vector<1x16xf32>,
      %cst_15 = arith.constant 1.000000e+00 : f32
      %19 = vector.broadcast %cst_15 : f32 to vector<1x8xf32>
      %c0_16 = arith.constant 0 : index
      %c0_17 = arith.constant 0 : index
      %20 = vector.load %arg7[%c0_16, %c0_17] : memref<1x8xf32, #tpu.memory_space<vmem>>, vector<1x8xf32>
      tpu.vector_store %arg7[%c0_16, %c0_17], %19 {strides = array<i32>} : memref<1x8xf32, #tpu.memory_space<vmem>>, vector<1x8xf32>,
    } else {
    }
    %c0 = arith.constant 0 : index
    %c0_1 = arith.constant 0 : index
    %3 = vector.load %arg1[%c0, %c0_1] : memref<8x16xf32, #tpu.memory_space<vmem>>, vector<8x16xf32>
    %c2_i32 = arith.constant 2 : i32
    %4 = arith.cmpi slt, %arg0, %c2_i32 : i32
    %5 = arith.extui %4 : i1 to i32
    %c0_i32_2 = arith.constant 0 : i32
    %6 = arith.cmpi ne, %5, %c0_i32_2 : i32
    scf.if %6 {
      %cst = arith.constant 5.000000e-01 : f32
      %13 = vector.broadcast %cst : f32 to vector<8x16xf32>
      %14 = arith.cmpf oge, %3, %13 : vector<8x16xf32>
      %cst_7 = arith.constant 0.000000e+00 : f32
      %15 = vector.broadcast %cst_7 : f32 to vector<8x16xf32>
      %16 = arith.select %14, %3, %15 : vector<8x16xi1>, vector<8x16xf32>
      %c0_8 = arith.constant 0 : index
      %c0_9 = arith.constant 0 : index
      %17 = vector.load %arg7[%c0_8, %c0_9] : memref<1x8xf32, #tpu.memory_space<vmem>>, vector<1x8xf32>
      %c0_10 = arith.constant 0 : index
      %c0_11 = arith.constant 0 : index
      %18 = vector.load %arg4[%c0_10, %c0_11] : memref<16x16xf32, #tpu.memory_space<vmem>>, vector<16x16xf32>
      %cst_12 = arith.constant dense<0.000000e+00> : vector<16x16xf32>
      %19 = tpu.matmul %16, %16, %cst_12 {dimension_numbers = #tpu.dot_dimension_numbers<[0], [0], [1], [1], [0, 1, 1, 1], [], []>} : vector<8x16xf32>, vector<8x16xf32>, vector<16x16xf32> -> vector<16x16xf32>
      %20 = arith.addf %18, %19 : vector<16x16xf32>
      %c0_13 = arith.constant 0 : index
      %c0_14 = arith.constant 0 : index
      %21 = vector.load %arg4[%c0_13, %c0_14] : memref<16x16xf32, #tpu.memory_space<vmem>>, vector<16x16xf32>
      tpu.vector_store %arg4[%c0_13, %c0_14], %20 {strides = array<i32>} : memref<16x16xf32, #tpu.memory_space<vmem>>, vector<16x16xf32>,
      %c0_15 = arith.constant 0 : index
      %c0_16 = arith.constant 0 : index
      %22 = vector.load %arg5[%c0_15, %c0_16] : memref<1x16xf32, #tpu.memory_space<vmem>>, vector<1x16xf32>
      %cst_17 = arith.constant dense<0.000000e+00> : vector<1x16xf32>
      %23 = tpu.matmul %17, %16, %cst_17 {dimension_numbers = #tpu.dot_dimension_numbers<[1], [0], [0], [1], [0, 0, 1, 1], [], []>} : vector<1x8xf32>, vector<8x16xf32>, vector<1x16xf32> -> vector<1x16xf32>
      %24 = arith.addf %22, %23 : vector<1x16xf32>
      %c0_18 = arith.constant 0 : index
      %c0_19 = arith.constant 0 : index
      %25 = vector.load %arg5[%c0_18, %c0_19] : memref<1x16xf32, #tpu.memory_space<vmem>>, vector<1x16xf32>
      tpu.vector_store %arg5[%c0_18, %c0_19], %24 {strides = array<i32>} : memref<1x16xf32, #tpu.memory_space<vmem>>, vector<1x16xf32>,
      %c0_20 = arith.constant 0 : index
      %c0_21 = arith.constant 0 : index
      %26 = vector.load %arg6[%c0_20, %c0_21] : memref<1x16xf32, #tpu.memory_space<vmem>>, vector<1x16xf32>
      %cst_22 = arith.constant dense<0.000000e+00> : vector<1x16xf32>
      %27 = tpu.matmul %17, %3, %cst_22 {dimension_numbers = #tpu.dot_dimension_numbers<[1], [0], [0], [1], [0, 0, 1, 1], [], []>} : vector<1x8xf32>, vector<8x16xf32>, vector<1x16xf32> -> vector<1x16xf32>
      %28 = arith.addf %26, %27 : vector<1x16xf32>
      %c0_23 = arith.constant 0 : index
      %c0_24 = arith.constant 0 : index
      %29 = vector.load %arg6[%c0_23, %c0_24] : memref<1x16xf32, #tpu.memory_space<vmem>>, vector<1x16xf32>
      tpu.vector_store %arg6[%c0_23, %c0_24], %28 {strides = array<i32>} : memref<1x16xf32, #tpu.memory_space<vmem>>, vector<1x16xf32>,
    } else {
    }
    %c2_i32_3 = arith.constant 2 : i32
    %7 = arith.cmpi eq, %arg0, %c2_i32_3 : i32
    %8 = arith.extui %7 : i1 to i32
    %c0_i32_4 = arith.constant 0 : i32
    %9 = arith.cmpi ne, %8, %c0_i32_4 : i32
    scf.if %9 {
      %c8_i32 = arith.constant 8 : i32
      %13 = arith.muli %arg0, %c8_i32 : i32
      %c20_i32 = arith.constant 20 : i32
      %14 = arith.subi %c20_i32, %13 : i32
      %15 = tpu.iota {dimensions = array<i32: 0>} : vector<8x1xi32>
      %16 = vector.broadcast %14 : i32 to vector<8x1xi32>
      %17 = arith.cmpi slt, %15, %16 : vector<8x1xi32>
      %cst = arith.constant 0.000000e+00 : f32
      %18 = vector.shape_cast %17 : vector<8x1xi1> to vector<8x1xi1>
      %19 = vector.broadcast %18 : vector<8x1xi1> to vector<8x16xi1>
      %20 = vector.broadcast %cst : f32 to vector<8x16xf32>
      %21 = arith.select %19, %3, %20 : vector<8x16xi1>, vector<8x16xf32>
      %cst_7 = arith.constant 5.000000e-01 : f32
      %22 = vector.broadcast %cst_7 : f32 to vector<8x16xf32>
      %23 = arith.cmpf oge, %21, %22 : vector<8x16xf32>
      %cst_8 = arith.constant 0.000000e+00 : f32
      %24 = vector.broadcast %cst_8 : f32 to vector<8x16xf32>
      %25 = arith.select %23, %21, %24 : vector<8x16xi1>, vector<8x16xf32>
      %c0_9 = arith.constant 0 : index
      %c0_10 = arith.constant 0 : index
      %26 = vector.load %arg7[%c0_9, %c0_10] : memref<1x8xf32, #tpu.memory_space<vmem>>, vector<1x8xf32>
      %c0_11 = arith.constant 0 : index
      %c0_12 = arith.constant 0 : index
      %27 = vector.load %arg4[%c0_11, %c0_12] : memref<16x16xf32, #tpu.memory_space<vmem>>, vector<16x16xf32>
      %cst_13 = arith.constant dense<0.000000e+00> : vector<16x16xf32>
      %28 = tpu.matmul %25, %25, %cst_13 {dimension_numbers = #tpu.dot_dimension_numbers<[0], [0], [1], [1], [0, 1, 1, 1], [], []>} : vector<8x16xf32>, vector<8x16xf32>, vector<16x16xf32> -> vector<16x16xf32>
      %29 = arith.addf %27, %28 : vector<16x16xf32>
      %c0_14 = arith.constant 0 : index
      %c0_15 = arith.constant 0 : index
      %30 = vector.load %arg4[%c0_14, %c0_15] : memref<16x16xf32, #tpu.memory_space<vmem>>, vector<16x16xf32>
      tpu.vector_store %arg4[%c0_14, %c0_15], %29 {strides = array<i32>} : memref<16x16xf32, #tpu.memory_space<vmem>>, vector<16x16xf32>,
      %c0_16 = arith.constant 0 : index
      %c0_17 = arith.constant 0 : index
      %31 = vector.load %arg5[%c0_16, %c0_17] : memref<1x16xf32, #tpu.memory_space<vmem>>, vector<1x16xf32>
      %cst_18 = arith.constant dense<0.000000e+00> : vector<1x16xf32>
      %32 = tpu.matmul %26, %25, %cst_18 {dimension_numbers = #tpu.dot_dimension_numbers<[1], [0], [0], [1], [0, 0, 1, 1], [], []>} : vector<1x8xf32>, vector<8x16xf32>, vector<1x16xf32> -> vector<1x16xf32>
      %33 = arith.addf %31, %32 : vector<1x16xf32>
      %c0_19 = arith.constant 0 : index
      %c0_20 = arith.constant 0 : index
      %34 = vector.load %arg5[%c0_19, %c0_20] : memref<1x16xf32, #tpu.memory_space<vmem>>, vector<1x16xf32>
      tpu.vector_store %arg5[%c0_19, %c0_20], %33 {strides = array<i32>} : memref<1x16xf32, #tpu.memory_space<vmem>>, vector<1x16xf32>,
      %c0_21 = arith.constant 0 : index
      %c0_22 = arith.constant 0 : index
      %35 = vector.load %arg6[%c0_21, %c0_22] : memref<1x16xf32, #tpu.memory_space<vmem>>, vector<1x16xf32>
      %cst_23 = arith.constant dense<0.000000e+00> : vector<1x16xf32>
      %36 = tpu.matmul %26, %21, %cst_23 {dimension_numbers = #tpu.dot_dimension_numbers<[1], [0], [0], [1], [0, 0, 1, 1], [], []>} : vector<1x8xf32>, vector<8x16xf32>, vector<1x16xf32> -> vector<1x16xf32>
      %37 = arith.addf %35, %36 : vector<1x16xf32>
      %c0_24 = arith.constant 0 : index
      %c0_25 = arith.constant 0 : index
      %38 = vector.load %arg6[%c0_24, %c0_25] : memref<1x16xf32, #tpu.memory_space<vmem>>, vector<1x16xf32>
      tpu.vector_store %arg6[%c0_24, %c0_25], %37 {strides = array<i32>} : memref<1x16xf32, #tpu.memory_space<vmem>>, vector<1x16xf32>,
    } else {
    }
    %c2_i32_5 = arith.constant 2 : i32
    %10 = arith.cmpi eq, %arg0, %c2_i32_5 : i32
    %11 = arith.extui %10 : i1 to i32
    %c0_i32_6 = arith.constant 0 : i32
    %12 = arith.cmpi ne, %11, %c0_i32_6 : i32
    scf.if %12 {
      %c0_7 = arith.constant 0 : index
      %c0_8 = arith.constant 0 : index
      %13 = vector.load %arg2[%c0_7, %c0_8] : memref<16x28xf32, #tpu.memory_space<vmem>>, vector<16x28xf32>
      %c0_9 = arith.constant 0 : index
      %c0_10 = arith.constant 0 : index
      %14 = vector.load %arg5[%c0_9, %c0_10] : memref<1x16xf32, #tpu.memory_space<vmem>>, vector<1x16xf32>
      %cst = arith.constant 5.000000e-02 : f32
      %15 = vector.broadcast %cst : f32 to vector<1x16xf32>
      %16 = arith.mulf %14, %15 : vector<1x16xf32>
      %c0_11 = arith.constant 0 : index
      %c0_12 = arith.constant 0 : index
      %17 = vector.load %arg6[%c0_11, %c0_12] : memref<1x16xf32, #tpu.memory_space<vmem>>, vector<1x16xf32>
      %c0_13 = arith.constant 0 : index
      %c0_14 = arith.constant 0 : index
      %18 = vector.load %arg5[%c0_13, %c0_14] : memref<1x16xf32, #tpu.memory_space<vmem>>, vector<1x16xf32>
      %19 = arith.subf %17, %18 : vector<1x16xf32>
      %cst_15 = arith.constant 5.000000e-02 : f32
      %20 = vector.broadcast %cst_15 : f32 to vector<1x16xf32>
      %21 = arith.mulf %19, %20 : vector<1x16xf32>
      %cst_16 = arith.constant dense<0.000000e+00> : vector<1x28xf32>
      %22 = tpu.matmul %16, %13, %cst_16 {dimension_numbers = #tpu.dot_dimension_numbers<[1], [0], [0], [1], [0, 0, 1, 1], [], []>} : vector<1x16xf32>, vector<16x28xf32>, vector<1x28xf32> -> vector<1x28xf32>
      %cst_17 = arith.constant dense<0.000000e+00> : vector<1x28xf32>
      %23 = tpu.matmul %21, %13, %cst_17 {dimension_numbers = #tpu.dot_dimension_numbers<[1], [0], [0], [1], [0, 0, 1, 1], [], []>} : vector<1x16xf32>, vector<16x28xf32>, vector<1x28xf32> -> vector<1x28xf32>
      %c0_18 = arith.constant 0 : index
      %c0_19 = arith.constant 0 : index
      %24 = vector.load %arg4[%c0_18, %c0_19] : memref<16x16xf32, #tpu.memory_space<vmem>>, vector<16x16xf32>
      %cst_20 = arith.constant 5.000000e-02 : f32
      %25 = vector.broadcast %cst_20 : f32 to vector<16x16xf32>
      %26 = arith.mulf %24, %25 : vector<16x16xf32>
      %cst_21 = arith.constant dense<0.000000e+00> : vector<16x28xf32>
      %27 = tpu.matmul %26, %13, %cst_21 {dimension_numbers = #tpu.dot_dimension_numbers<[1], [0], [0], [1], [0, 0, 1, 1], [], []>} : vector<16x16xf32>, vector<16x28xf32>, vector<16x28xf32> -> vector<16x28xf32>
      %28 = vector.extract_strided_slice %22 {offsets = [0, 0], sizes = [1, 14], strides = [1, 1]} : vector<1x28xf32> to vector<1x14xf32>
      %29 = vector.extract_strided_slice %22 {offsets = [0, 14], sizes = [1, 14], strides = [1, 1]} : vector<1x28xf32> to vector<1x14xf32>
      %30 = vector.extract_strided_slice %23 {offsets = [0, 0], sizes = [1, 14], strides = [1, 1]} : vector<1x28xf32> to vector<1x14xf32>
      %31 = vector.extract_strided_slice %23 {offsets = [0, 14], sizes = [1, 14], strides = [1, 1]} : vector<1x28xf32> to vector<1x14xf32>
      %32 = vector.extract_strided_slice %13 {offsets = [0, 0], sizes = [16, 14], strides = [1, 1]} : vector<16x28xf32> to vector<16x14xf32>
      %33 = vector.extract_strided_slice %27 {offsets = [0, 14], sizes = [16, 14], strides = [1, 1]} : vector<16x28xf32> to vector<16x14xf32>
      %34 = arith.mulf %32, %33 : vector<16x14xf32>
      %cst_22 = arith.constant dense<0.000000e+00> : vector<14xf32>
      %35 = vector.multi_reduction <add>, %34, %cst_22 [0] : vector<16x14xf32> to vector<14xf32>
      %36 = vector.shape_cast %35 : vector<14xf32> to vector<1x14xf32>
      %37 = tpu.iota {dimensions = array<i32: 1>} : vector<1x14xi32>
      %c10_i32 = arith.constant 10 : i32
      %38 = vector.broadcast %c10_i32 : i32 to vector<1x14xi32>
      %39 = arith.cmpi slt, %37, %38 : vector<1x14xi32>
      %cst_23 = arith.constant 1.000000e+00 : f32
      %cst_24 = arith.constant -1.000000e+00 : f32
      %40 = vector.broadcast %cst_23 : f32 to vector<1x14xf32>
      %41 = vector.broadcast %cst_24 : f32 to vector<1x14xf32>
      %42 = arith.select %39, %40, %41 : vector<1x14xi1>, vector<1x14xf32>
      %43 = arith.mulf %28, %29 : vector<1x14xf32>
      %44 = arith.subf %43, %36 : vector<1x14xf32>
      %cst_25 = arith.constant 0.000000e+00 : f32
      %45 = vector.broadcast %cst_25 : f32 to vector<1x14xf32>
      %46 = arith.maximumf %44, %45 : vector<1x14xf32>
      %47 = arith.mulf %30, %29 : vector<1x14xf32>
      %48 = arith.subf %47, %36 : vector<1x14xf32>
      %49 = arith.mulf %42, %48 : vector<1x14xf32>
      %cst_26 = arith.constant 0.000000e+00 : f32
      %50 = vector.broadcast %cst_26 : f32 to vector<1x14xf32>
      %51 = arith.maximumf %49, %50 : vector<1x14xf32>
      %52 = arith.mulf %28, %31 : vector<1x14xf32>
      %53 = arith.subf %52, %36 : vector<1x14xf32>
      %54 = arith.mulf %42, %53 : vector<1x14xf32>
      %cst_27 = arith.constant 0.000000e+00 : f32
      %55 = vector.broadcast %cst_27 : f32 to vector<1x14xf32>
      %56 = arith.maximumf %54, %55 : vector<1x14xf32>
      %57 = arith.addf %46, %51 : vector<1x14xf32>
      %58 = arith.addf %57, %56 : vector<1x14xf32>
      %cst_28 = arith.constant dense<0.000000e+00> : vector<1xf32>
      %59 = vector.multi_reduction <add>, %58, %cst_28 [1] : vector<1x14xf32> to vector<1xf32>
      %60 = vector.shape_cast %59 : vector<1xf32> to vector<1x1xf32>
      %c0_29 = arith.constant 0 : index
      %c0_30 = arith.constant 0 : index
      %61 = vector.load %arg3[%c0_29, %c0_30] : memref<1x1xf32, #tpu.memory_space<vmem>>, vector<1x1xf32>
      tpu.vector_store %arg3[%c0_29, %c0_30], %60 {strides = array<i32>} : memref<1x1xf32, #tpu.memory_space<vmem>>, vector<1x1xf32>,
    } else {
    }
    return
  }
  func.func @transform_0(%arg0: i32) -> (i32, i32) {
    %c0_i32 = arith.constant 0 : i32
    %c0_i32_0 = arith.constant 0 : i32
    return %arg0, %c0_i32 : i32, i32
  }
  func.func @transform_1(%arg0: i32) -> (i32, i32) {
    %c0_i32 = arith.constant 0 : i32
    %c0_i32_0 = arith.constant 0 : i32
    %c0_i32_1 = arith.constant 0 : i32
    return %c0_i32, %c0_i32_0 : i32, i32
  }
  func.func @transform_2(%arg0: i32) -> (i32, i32) {
    %c0_i32 = arith.constant 0 : i32
    %c0_i32_0 = arith.constant 0 : i32
    %c0_i32_1 = arith.constant 0 : i32
    return %c0_i32, %c0_i32_0 : i32, i32
  }
}

</mosaic_0001>

<llo_original>
// kernel: tpu_custom_call.1
$region0: #{tpu_custom_call.1}
  #allocation0 [shape = 'u32[]', space=smem, size = 0x4, offset = 0x4, fixed_abs, tag = 'smem constant byte address 0x4 - core index']
  #allocation1 [shape = 'u32[144,128]{1,0:T(1,128)}', space=vmem, size = 0x12000, scoped, tag = 'internal scratch']
  #allocation2 [shape = 'f32[16,16]{1,0:T(8,128)}', space=vmem, size = 0x2000, scoped, tag = 'scratch operand']
  #allocation3 [shape = 'f32[1,16]{1,0:T(1,128)}', space=vmem, size = 0x200, scoped, tag = 'scratch operand']
  #allocation4 [shape = 'f32[1,16]{1,0:T(1,128)}', space=vmem, size = 0x200, scoped, tag = 'scratch operand']
  #allocation5 [shape = 'f32[1,8]{1,0:T(1,128)}', space=vmem, size = 0x200, scoped, tag = 'scratch operand']
  %s0 = inlined_call_operand.vmem [shape: f32[20,16], index: 0, kind: input, shape index: {}]
  %s1 = inlined_call_operand.vmem [shape: f32[16,28], index: 1, kind: input, shape index: {}]
  %s2 = inlined_call_operand.hbm [shape: f32[1,1], index: 2, kind: output, shape index: {}]
  %s3 = sld [smem:[#allocation0]]
  $region53: #{tpu_custom_call.1} parent=0
    _
  %s5 = ssub.s32 1, %s3
  %s6 = scalar_select 0, %s5, %s3
  $region1: #{tpu_custom_call.1} parent=0
    #allocation6 [shape = 'u8[512]{0}', space=vmem, size = 0x400, scoped, tag = 'output window, operand 0, single buffered']
    #allocation7 [shape = 's32[2]{0}', space=sflag, size = 0x8, scoped, tag = 'scoped memory for tpu_custom_call.1']
    %7 = vsyncpa [#allocation7], 0
    loop: start=0, step=1, limit=5
    $region2: #{tpu_custom_call.1} parent=1 // loop_pre_header
      _
    $region3: #{tpu_custom_call.1} parent=1 // loop_header
      %s9 = sphi 0, %s13
      %p10 = scmp.ge.s32.totalorder %s9, 5
      %s19 = sphi 0, %s21
      %s22 = sphi 0, %s19
      %s23 = sphi 0, %s22
      %s39 = sphi 0, %s23
      %s43 = sphi 0, %s43
      %s45 = sphi 0, %s43
      %s46 = sphi 0, %s45
      %s60 = sphi 0, %s46
      %s64 = sphi 0, %s64
      %s66 = sphi 0, %s64
      %s67 = sphi 0, %s66
      %s81 = sphi 0, %s67
    $region4: #{tpu_custom_call.1} parent=1 // loop_header_branch
      %12 = sbr.rel (%p10) target = $region8
    $region5: #{tpu_custom_call.1} parent=1 // loop_body
      %s14 = ssub.s32 %s9, 1
      %s15 = ssub.s32 %s9, 2
      %s16 = sadd.s32 %s9, 1
      %s17 = ssub.s32 %s9, %s16
      %p18 = scmp.eq.s32.totalorder %s17, 0
      %s20 = sadd.s32 %s19, 1
      %s21 = scalar_select %p18, %s19, %s20
      %p24 = pneg %p18
      %p25 = scmp.eq.s32.totalorder %s9, 2
      %p26 = por %p24, %p25
      %p27 = scmp.ne.s32.totalorder %s19, %s22
      %p28 = scmp.eq.s32.totalorder %s9, 0
      %p29 = por %p27, %p28
      %p30 = scmp.ne.s32.totalorder %s19, %s22
      %p31 = scmp.eq.s32.totalorder %s14, 2
      %p32 = por %p30, %p31
      %p33 = scmp.ne.s32.totalorder %s22, %s23
      %p34 = scmp.eq.s32.totalorder %s14, 0
      %p35 = por %p33, %p34
      %p36 = scmp.ne.s32.totalorder %s22, %s23
      %p37 = scmp.eq.s32.totalorder %s15, 2
      %p38 = por %p36, %p37
      %p40 = scmp.ne.s32.totalorder %s23, %s39
      %p41 = scmp.eq.s32.totalorder %s15, 0
      %p42 = por %p40, %p41
      %s44 = sadd.s32 %s43, 1
      %p47 = scmp.eq.s32.totalorder %s9, 2
      %p48 = scmp.ne.s32.totalorder %s43, %s45
      %p49 = scmp.eq.s32.totalorder %s9, 0
      %p50 = por %p48, %p49
      %p51 = scmp.ne.s32.totalorder %s43, %s45
      %p52 = scmp.eq.s32.totalorder %s14, 2
      %p53 = por %p51, %p52
      %p54 = scmp.ne.s32.totalorder %s45, %s46
      %p55 = scmp.eq.s32.totalorder %s14, 0
      %p56 = por %p54, %p55
      %p57 = scmp.ne.s32.totalorder %s45, %s46
      %p58 = scmp.eq.s32.totalorder %s15, 2
      %p59 = por %p57, %p58
      %p61 = scmp.ne.s32.totalorder %s46, %s60
      %p62 = scmp.eq.s32.totalorder %s15, 0
      %p63 = por %p61, %p62
      %s65 = sadd.s32 %s64, 1
      %p68 = scmp.eq.s32.totalorder %s9, 2
      %p69 = scmp.ne.s32.totalorder %s64, %s66
      %p70 = scmp.eq.s32.totalorder %s9, 0
      %p71 = por %p69, %p70
      %p72 = scmp.ne.s32.totalorder %s64, %s66
      %p73 = scmp.eq.s32.totalorder %s14, 2
      %p74 = por %p72, %p73
      %p75 = scmp.ne.s32.totalorder %s66, %s67
      %p76 = scmp.eq.s32.totalorder %s14, 0
      %p77 = por %p75, %p76
      %p78 = scmp.ne.s32.totalorder %s66, %s67
      %p79 = scmp.eq.s32.totalorder %s15, 2
      %p80 = por %p78, %p79
      %p82 = scmp.ne.s32.totalorder %s67, %s81
      %p83 = scmp.eq.s32.totalorder %s15, 0
      %p84 = por %p82, %p83
      %p85 = scmp.le.s32.totalorder 1, %s9
      %p86 = scmp.lt.s32.totalorder %s9, 4
      %p87 = pnand %p85, %p86
      %p88 = pneg %p87
      // Predicated region
      $region9: #{tpu_custom_call.1} parent=5 // pred_check
        _
      $region10: #{tpu_custom_call.1} parent=5 // pred_check_branch
        %90 = sbr.rel (%p87) target = $region12
      $region11: #{tpu_custom_call.1} parent=5 // pred_region
        %s91 = ssub.s32 %s9, 1
        // Predicated region
        $region13: #{tpu_custom_call.1} parent=11 // pred_check
          %p92 = pneg %p56
        $region14: #{tpu_custom_call.1} parent=11 // pred_check_branch
          %94 = sbr.rel (%p92) target = $region16
        $region15: #{tpu_custom_call.1} parent=11 // pred_region
          _
        $region16: #{tpu_custom_call.1} parent=11 // pred_fallthru
          _
      $region12: #{tpu_custom_call.1} parent=5 // pred_fallthru
        _
      %p95 = scmp.lt.s32.totalorder %s9, 3
      // Predicated region
      $region17: #{tpu_custom_call.1} parent=5 // pred_check
        %p96 = pneg %p95
      $region18: #{tpu_custom_call.1} parent=5 // pred_check_branch
        %98 = sbr.rel (%p96) target = $region20
      $region19: #{tpu_custom_call.1} parent=5 // pred_region
        // Predicated region
        $region21: #{tpu_custom_call.1} parent=19 // pred_check
          %p99 = pneg %p29
        $region22: #{tpu_custom_call.1} parent=19 // pred_check_branch
          %101 = sbr.rel (%p99) target = $region24
        $region23: #{tpu_custom_call.1} parent=19 // pred_region
          %p102 = scmp.lt.s32.totalorder %s9, 2
          %s103 = scalar_select %p102, %s9, 2
          %s104 = smul.addr %s103, 8
          %s105 = scalar_lea.vmem %s0, %s104
        $region24: #{tpu_custom_call.1} parent=19 // pred_fallthru
          _
      $region20: #{tpu_custom_call.1} parent=5 // pred_fallthru
        _
      %p106 = scmp.le.s32.totalorder 1, %s9
      %p107 = scmp.lt.s32.totalorder %s9, 4
      %p108 = pnand %p106, %p107
      %p109 = pneg %p108
      // Predicated region
      $region25: #{tpu_custom_call.1} parent=5 // pred_check
        _
      $region26: #{tpu_custom_call.1} parent=5 // pred_check_branch
        %111 = sbr.rel (%p108) target = $region28
      $region27: #{tpu_custom_call.1} parent=5 // pred_region
        %s112 = ssub.s32 %s9, 1
        %p113 = scmp.lt.s32.totalorder %s14, 2
        %s114 = scalar_select %p113, %s14, 2
        %s115 = smul.addr %s114, 8
        %s116 = scalar_lea.vmem %s0, %s115
        %p117 = pneg %p35
        %p118 = pneg %p32
        %p119 = pneg %p56
        %p120 = pneg %p53
        %p121 = pneg %p77
        %p122 = pneg %p74
        %p123 = scmp.lt.s32.totalorder %s14, 2
        %s124 = scalar_select %p123, %s14, 2
        %s125 = smul.addr %s124, 8
        %s126 = scalar_lea.vmem %s0, %s125
        %p127 = scmp.eq.s32.totalorder %s14, 0
        // Predicated region
        $region29: #{tpu_custom_call.1} parent=27 // pred_check
          %p128 = pneg %p127
        $region30: #{tpu_custom_call.1} parent=27 // pred_check_branch
          %130 = sbr.rel (%p128) target = $region32
        $region31: #{tpu_custom_call.1} parent=27 // pred_region
          %vm131 = vcmask 130048
          %132 = vst.msk [vmem:[#allocation2] sm:$0xff] %vm131, 0.0
          %133 = vst.msk [vmem:[#allocation2 + $0x8] sm:$0xff] %vm131, 0.0
          %vm134 = vcmask 122880
          %135 = vst.msk [vmem:[#allocation3] sm:$0x1] %vm134, 0.0
          %136 = vst.msk [vmem:[#allocation4] sm:$0x1] %vm134, 0.0
          %vm137 = vcmask 57344
          %138 = vst.msk [vmem:[#allocation5] sm:$0x1] %vm137, 1.0
        $region32: #{tpu_custom_call.1} parent=27 // pred_fallthru
          _
        %v139 = vld [vmem:[%s126] sm:$0xff]
        %p140 = scmp.lt.s32.totalorder %s14, 2
        // Predicated region
        $region33: #{tpu_custom_call.1} parent=27 // pred_check
          %p141 = pneg %p140
        $region34: #{tpu_custom_call.1} parent=27 // pred_check_branch
          %143 = sbr.rel (%p141) target = $region36
        $region35: #{tpu_custom_call.1} parent=27 // pred_region
          %vm144 = vcmp.ge.f32.partialorder %v139, 0.5
          %v145 = vsel %vm144, %v139, 0.0
          %v146 = vld [vmem:[#allocation5] sm:$0x1]
          %v147 = vld [vmem:[#allocation2] sm:$0xff]
          %v148 = vld [vmem:[#allocation2 + $0x8] sm:$0xff]
          %149 = vxpose.xlu0.b32.start [1/16] %v145, 128
          %150 = vxpose.xlu0.b32.cont [2/16] 0.0, 128
          %151 = vxpose.xlu0.b32.cont [3/16] 0.0, 128
          %152 = vxpose.xlu0.b32.cont [4/16] 0.0, 128
          %153 = vxpose.xlu0.b32.cont [5/16] 0.0, 128
          %154 = vxpose.xlu0.b32.cont [6/16] 0.0, 128
          %155 = vxpose.xlu0.b32.cont [7/16] 0.0, 128
          %156 = vxpose.xlu0.b32.cont [8/16] 0.0, 128
          %157 = vxpose.xlu0.b32.cont [9/16] 0.0, 128
          %158 = vxpose.xlu0.b32.cont [10/16] 0.0, 128
          %159 = vxpose.xlu0.b32.cont [11/16] 0.0, 128
          %160 = vxpose.xlu0.b32.cont [12/16] 0.0, 128
          %161 = vxpose.xlu0.b32.cont [13/16] 0.0, 128
          %162 = vxpose.xlu0.b32.cont [14/16] 0.0, 128
          %163 = vxpose.xlu0.b32.cont [15/16] 0.0, 128
          %164 = vxpose.xlu0.b32.end [16/16] 0.0, 128
          %v165 = vpop.trf.xlu0
          %v166 = vpop.trf.xlu0
          %v167 = vpop.trf.xlu0
          %v168 = vpop.trf.xlu0
          %v169 = vpop.trf.xlu0
          %v170 = vpop.trf.xlu0
          %v171 = vpop.trf.xlu0
          %v172 = vpop.trf.xlu0
          %v173 = vpop.trf.xlu0
          %v174 = vpop.trf.xlu0
          %v175 = vpop.trf.xlu0
          %v176 = vpop.trf.xlu0
          %v177 = vpop.trf.xlu0
          %v178 = vpop.trf.xlu0
          %v179 = vpop.trf.xlu0
          %v180 = vpop.trf.xlu0
          %vm181 = vcmask 64512
          %v183 = vsel %vm181, %v165, 0
          %v186 = vsel %vm181, %v166, 0
          %188 = vmatprep.subr.mxu0 0.0
          %189 = vmatpush1.msra.mxu0 %v145
          %190 = vmatprep.subr.mxu0 0.0
          %191 = vmatpush1.msra.mxu0 0.0
          %192 = vmatprep.subr.mxu0 0.0
          %193 = vmatpush1.msra.mxu0 0.0
          %194 = vmatprep.subr.mxu0 0.0
          %195 = vmatpush1.msra.mxu0 0.0
          %196 = vmatprep.subr.mxu0 0.0
          %197 = vmatpush1.msra.mxu0 0.0
          %198 = vmatprep.subr.mxu0 0.0
          %199 = vmatpush1.msra.mxu0 0.0
          %200 = vmatprep.subr.mxu0 0.0
          %201 = vmatpush1.msra.mxu0 0.0
          %202 = vmatprep.subr.mxu0 0.0
          %203 = vmatpush1.msra.mxu0 0.0
          %204 = vmatprep.subr.mxu0 0.0
          %205 = vmatpush1.msra.mxu0 0.0
          %206 = vmatprep.subr.mxu0 0.0
          %207 = vmatpush1.msra.mxu0 0.0
          %208 = vmatprep.subr.mxu0 0.0
          %209 = vmatpush1.msra.mxu0 0.0
          %210 = vmatprep.subr.mxu0 0.0
          %211 = vmatpush1.msra.mxu0 0.0
          %212 = vmatprep.subr.mxu0 0.0
          %213 = vmatpush1.msra.mxu0 0.0
          %214 = vmatprep.subr.mxu0 0.0
          %215 = vmatpush1.msra.mxu0 0.0
          %216 = vmatprep.subr.mxu0 0.0
          %217 = vmatpush1.msra.mxu0 0.0
          %218 = vmatprep.subr.mxu0 0.0
          %219 = vmatpush1.msra.mxu0 0.0
          %220 = vmatprep.subr.mxu0 0.0
          %221 = vmatpush1.msra.mxu0 0.0
          %222 = vmatprep.subr.mxu0 0.0
          %223 = vmatpush1.msra.mxu0 0.0
          %224 = vmatprep.subr.mxu0 0.0
          %225 = vmatpush1.msra.mxu0 0.0
          %226 = vmatprep.subr.mxu0 0.0
          %227 = vmatpush1.msra.mxu0 0.0
          %228 = vmatprep.subr.mxu0 0.0
          %229 = vmatpush1.msra.mxu0 0.0
          %230 = vmatprep.subr.mxu0 0.0
          %231 = vmatpush1.msra.mxu0 0.0
          %232 = vmatprep.subr.mxu0 0.0
          %233 = vmatpush1.msra.mxu0 0.0
          %234 = vmatprep.subr.mxu0 0.0
          %235 = vmatpush1.msra.mxu0 0.0
          %236 = vmatprep.subr.mxu0 0.0
          %237 = vmatpush1.msra.mxu0 0.0
          %238 = vmatprep.subr.mxu0 0.0
          %239 = vmatpush1.msra.mxu0 0.0
          %240 = vmatprep.subr.mxu0 0.0
          %241 = vmatpush1.msra.mxu0 0.0
          %242 = vmatprep.subr.mxu0 0.0
          %243 = vmatpush1.msra.mxu0 0.0
          %244 = vmatprep.subr.mxu0 0.0
          %245 = vmatpush1.msra.mxu0 0.0
          %246 = vmatprep.subr.mxu0 0.0
          %247 = vmatpush1.msra.mxu0 0.0
          %248 = vmatprep.subr.mxu0 0.0
          %249 = vmatpush1.msra.mxu0 0.0
          %250 = vmatprep.subr.mxu0 0.0
          %251 = vmatpush1.msra.mxu0 0.0
          %252 = vmatprep.mubr.f32.mxu0 0.0
          %253 = vmatmul.mubr.f32.gmra.mrb[0].mxu0 %v183
          %v254 = vpop.f32.mrb[0].mxu0
          %v255 = vadd.f32 0.0, %v254
          %v256 = vpop.f32.mrb[0].mxu0
          %257 = vmatprep.mubr.f32.mxu0 0.0
          %258 = vmatmul.mubr.f32.gmra.mrb[0].mxu0 %v186
          %v259 = vpop.f32.mrb[0].mxu0
          %v260 = vadd.f32 0.0, %v259
          %v261 = vpop.f32.mrb[0].mxu0
          %262 = vdwg.mxu0
          %v263 = vadd.f32 %v147, %v255
          %v264 = vadd.f32 %v148, %v260
          %vm265 = vcmask 130048
          %266 = vst.msk [vmem:[#allocation2] sm:$0xff] %vm265, %v263
          %267 = vst.msk [vmem:[#allocation2 + $0x8] sm:$0xff] %vm265, %v264
          %v268 = vld [vmem:[#allocation3] sm:$0x1]
          %v270 = vsel %vm181, %v146, 0
          %272 = vmatprep.subr.mxu0 0.0
          %273 = vmatpush1.msra.mxu0 %v145
          %274 = vmatprep.subr.mxu0 0.0
          %275 = vmatpush1.msra.mxu0 0.0
          %276 = vmatprep.subr.mxu0 0.0
          %277 = vmatpush1.msra.mxu0 0.0
          %278 = vmatprep.subr.mxu0 0.0
          %279 = vmatpush1.msra.mxu0 0.0
          %280 = vmatprep.subr.mxu0 0.0
          %281 = vmatpush1.msra.mxu0 0.0
          %282 = vmatprep.subr.mxu0 0.0
          %283 = vmatpush1.msra.mxu0 0.0
          %284 = vmatprep.subr.mxu0 0.0
          %285 = vmatpush1.msra.mxu0 0.0
          %286 = vmatprep.subr.mxu0 0.0
          %287 = vmatpush1.msra.mxu0 0.0
          %288 = vmatprep.subr.mxu0 0.0
          %289 = vmatpush1.msra.mxu0 0.0
          %290 = vmatprep.subr.mxu0 0.0
          %291 = vmatpush1.msra.mxu0 0.0
          %292 = vmatprep.subr.mxu0 0.0
          %293 = vmatpush1.msra.mxu0 0.0
          %294 = vmatprep.subr.mxu0 0.0
          %295 = vmatpush1.msra.mxu0 0.0
          %296 = vmatprep.subr.mxu0 0.0
          %297 = vmatpush1.msra.mxu0 0.0
          %298 = vmatprep.subr.mxu0 0.0
          %299 = vmatpush1.msra.mxu0 0.0
          %300 = vmatprep.subr.mxu0 0.0
          %301 = vmatpush1.msra.mxu0 0.0
          %302 = vmatprep.subr.mxu0 0.0
          %303 = vmatpush1.msra.mxu0 0.0
          %304 = vmatprep.subr.mxu0 0.0
          %305 = vmatpush1.msra.mxu0 0.0
          %306 = vmatprep.subr.mxu0 0.0
          %307 = vmatpush1.msra.mxu0 0.0
          %308 = vmatprep.subr.mxu0 0.0
          %309 = vmatpush1.msra.mxu0 0.0
          %310 = vmatprep.subr.mxu0 0.0
          %311 = vmatpush1.msra.mxu0 0.0
          %312 = vmatprep.subr.mxu0 0.0
          %313 = vmatpush1.msra.mxu0 0.0
          %314 = vmatprep.subr.mxu0 0.0
          %315 = vmatpush1.msra.mxu0 0.0
          %316 = vmatprep.subr.mxu0 0.0
          %317 = vmatpush1.msra.mxu0 0.0
          %318 = vmatprep.subr.mxu0 0.0
          %319 = vmatpush1.msra.mxu0 0.0
          %320 = vmatprep.subr.mxu0 0.0
          %321 = vmatpush1.msra.mxu0 0.0
          %322 = vmatprep.subr.mxu0 0.0
          %323 = vmatpush1.msra.mxu0 0.0
          %324 = vmatprep.subr.mxu0 0.0
          %325 = vmatpush1.msra.mxu0 0.0
          %326 = vmatprep.subr.mxu0 0.0
          %327 = vmatpush1.msra.mxu0 0.0
          %328 = vmatprep.subr.mxu0 0.0
          %329 = vmatpush1.msra.mxu0 0.0
          %330 = vmatprep.subr.mxu0 0.0
          %331 = vmatpush1.msra.mxu0 0.0
          %332 = vmatprep.subr.mxu0 0.0
          %333 = vmatpush1.msra.mxu0 0.0
          %334 = vmatprep.subr.mxu0 0.0
          %335 = vmatpush1.msra.mxu0 0.0
          %336 = vmatprep.mubr.f32.mxu0 0.0
          %337 = vmatmul.mubr.f32.gmra.mrb[0].mxu0 %v270
          %v338 = vpop.f32.mrb[0].mxu0
          %v339 = vadd.f32 0.0, %v338
          %v340 = vpop.f32.mrb[0].mxu0
          %341 = vdwg.mxu0
          %v342 = vadd.f32 %v268, %v339
          %vm343 = vcmask 122880
          %344 = vst.msk [vmem:[#allocation3] sm:$0x1] %vm343, %v342
          %v345 = vld [vmem:[#allocation4] sm:$0x1]
          %346 = vmatprep.subr.mxu0 0.0
          %347 = vmatpush1.msra.mxu0 %v139
          %348 = vmatprep.subr.mxu0 0.0
          %349 = vmatpush1.msra.mxu0 0.0
          %350 = vmatprep.subr.mxu0 0.0
          %351 = vmatpush1.msra.mxu0 0.0
          %352 = vmatprep.subr.mxu0 0.0
          %353 = vmatpush1.msra.mxu0 0.0
          %354 = vmatprep.subr.mxu0 0.0
          %355 = vmatpush1.msra.mxu0 0.0
          %356 = vmatprep.subr.mxu0 0.0
          %357 = vmatpush1.msra.mxu0 0.0
          %358 = vmatprep.subr.mxu0 0.0
          %359 = vmatpush1.msra.mxu0 0.0
          %360 = vmatprep.subr.mxu0 0.0
          %361 = vmatpush1.msra.mxu0 0.0
          %362 = vmatprep.subr.mxu0 0.0
          %363 = vmatpush1.msra.mxu0 0.0
          %364 = vmatprep.subr.mxu0 0.0
          %365 = vmatpush1.msra.mxu0 0.0
          %366 = vmatprep.subr.mxu0 0.0
          %367 = vmatpush1.msra.mxu0 0.0
          %368 = vmatprep.subr.mxu0 0.0
          %369 = vmatpush1.msra.mxu0 0.0
          %370 = vmatprep.subr.mxu0 0.0
          %371 = vmatpush1.msra.mxu0 0.0
          %372 = vmatprep.subr.mxu0 0.0
          %373 = vmatpush1.msra.mxu0 0.0
          %374 = vmatprep.subr.mxu0 0.0
          %375 = vmatpush1.msra.mxu0 0.0
          %376 = vmatprep.subr.mxu0 0.0
          %377 = vmatpush1.msra.mxu0 0.0
          %378 = vmatprep.subr.mxu0 0.0
          %379 = vmatpush1.msra.mxu0 0.0
          %380 = vmatprep.subr.mxu0 0.0
          %381 = vmatpush1.msra.mxu0 0.0
          %382 = vmatprep.subr.mxu0 0.0
          %383 = vmatpush1.msra.mxu0 0.0
          %384 = vmatprep.subr.mxu0 0.0
          %385 = vmatpush1.msra.mxu0 0.0
          %386 = vmatprep.subr.mxu0 0.0
          %387 = vmatpush1.msra.mxu0 0.0
          %388 = vmatprep.subr.mxu0 0.0
          %389 = vmatpush1.msra.mxu0 0.0
          %390 = vmatprep.subr.mxu0 0.0
          %391 = vmatpush1.msra.mxu0 0.0
          %392 = vmatprep.subr.mxu0 0.0
          %393 = vmatpush1.msra.mxu0 0.0
          %394 = vmatprep.subr.mxu0 0.0
          %395 = vmatpush1.msra.mxu0 0.0
          %396 = vmatprep.subr.mxu0 0.0
          %397 = vmatpush1.msra.mxu0 0.0
          %398 = vmatprep.subr.mxu0 0.0
          %399 = vmatpush1.msra.mxu0 0.0
          %400 = vmatprep.subr.mxu0 0.0
          %401 = vmatpush1.msra.mxu0 0.0
          %402 = vmatprep.subr.mxu0 0.0
          %403 = vmatpush1.msra.mxu0 0.0
          %404 = vmatprep.subr.mxu0 0.0
          %405 = vmatpush1.msra.mxu0 0.0
          %406 = vmatprep.subr.mxu0 0.0
          %407 = vmatpush1.msra.mxu0 0.0
          %408 = vmatprep.subr.mxu0 0.0
          %409 = vmatpush1.msra.mxu0 0.0
          %410 = vmatprep.mubr.f32.mxu0 0.0
          %411 = vmatmul.mubr.f32.gmra.mrb[0].mxu0 %v270
          %v412 = vpop.f32.mrb[0].mxu0
          %v413 = vadd.f32 0.0, %v412
          %v414 = vpop.f32.mrb[0].mxu0
          %415 = vdwg.mxu0
          %v416 = vadd.f32 %v345, %v413
          %417 = vst.msk [vmem:[#allocation4] sm:$0x1] %vm343, %v416
        $region36: #{tpu_custom_call.1} parent=27 // pred_fallthru
          _
        %p418 = scmp.eq.s32.totalorder %s14, 2
        // Predicated region
        $region37: #{tpu_custom_call.1} parent=27 // pred_check
          %p419 = pneg %p418
        $region38: #{tpu_custom_call.1} parent=27 // pred_check_branch
          %421 = sbr.rel (%p419) target = $region40
        $region39: #{tpu_custom_call.1} parent=27 // pred_region
          %s422 = smul.u32 %s14, 8
          %s423 = ssub.s32 20, %s422
          %v424 = vlaneseq
          %v425 = vshrl.u32 %v424, 7
          %v426 = vstv %s423
          %vm427 = vcmp.lt.s32.totalorder %v425, %v426
          %v428 = vsel %vm427, 1, 0
          %vm429 = vcmp.eq.s32.totalorder %v428, 1
          %v430 = vsel %vm429, %v139, 0.0
          %vm431 = vcmp.ge.f32.partialorder %v430, 0.5
          %v432 = vsel %vm431, %v430, 0.0
          %v433 = vld [vmem:[#allocation5] sm:$0x1]
          %v434 = vld [vmem:[#allocation2] sm:$0xff]
          %v435 = vld [vmem:[#allocation2 + $0x8] sm:$0xff]
          %436 = vxpose.xlu0.b32.start [1/16] %v432, 128
          %437 = vxpose.xlu0.b32.cont [2/16] 0.0, 128
          %438 = vxpose.xlu0.b32.cont [3/16] 0.0, 128
          %439 = vxpose.xlu0.b32.cont [4/16] 0.0, 128
          %440 = vxpose.xlu0.b32.cont [5/16] 0.0, 128
          %441 = vxpose.xlu0.b32.cont [6/16] 0.0, 128
          %442 = vxpose.xlu0.b32.cont [7/16] 0.0, 128
          %443 = vxpose.xlu0.b32.cont [8/16] 0.0, 128
          %444 = vxpose.xlu0.b32.cont [9/16] 0.0, 128
          %445 = vxpose.xlu0.b32.cont [10/16] 0.0, 128
          %446 = vxpose.xlu0.b32.cont [11/16] 0.0, 128
          %447 = vxpose.xlu0.b32.cont [12/16] 0.0, 128
          %448 = vxpose.xlu0.b32.cont [13/16] 0.0, 128
          %449 = vxpose.xlu0.b32.cont [14/16] 0.0, 128
          %450 = vxpose.xlu0.b32.cont [15/16] 0.0, 128
          %451 = vxpose.xlu0.b32.end [16/16] 0.0, 128
          %v452 = vpop.trf.xlu0
          %v453 = vpop.trf.xlu0
          %v454 = vpop.trf.xlu0
          %v455 = vpop.trf.xlu0
          %v456 = vpop.trf.xlu0
          %v457 = vpop.trf.xlu0
          %v458 = vpop.trf.xlu0
          %v459 = vpop.trf.xlu0
          %v460 = vpop.trf.xlu0
          %v461 = vpop.trf.xlu0
          %v462 = vpop.trf.xlu0
          %v463 = vpop.trf.xlu0
          %v464 = vpop.trf.xlu0
          %v465 = vpop.trf.xlu0
          %v466 = vpop.trf.xlu0
          %v467 = vpop.trf.xlu0
          %vm468 = vcmask 64512
          %v470 = vsel %vm468, %v452, 0
          %v473 = vsel %vm468, %v453, 0
          %475 = vmatprep.subr.mxu0 0.0
          %476 = vmatpush1.msra.mxu0 %v432
          %477 = vmatprep.subr.mxu0 0.0
          %478 = vmatpush1.msra.mxu0 0.0
          %479 = vmatprep.subr.mxu0 0.0
          %480 = vmatpush1.msra.mxu0 0.0
          %481 = vmatprep.subr.mxu0 0.0
          %482 = vmatpush1.msra.mxu0 0.0
          %483 = vmatprep.subr.mxu0 0.0
          %484 = vmatpush1.msra.mxu0 0.0
          %485 = vmatprep.subr.mxu0 0.0
          %486 = vmatpush1.msra.mxu0 0.0
          %487 = vmatprep.subr.mxu0 0.0
          %488 = vmatpush1.msra.mxu0 0.0
          %489 = vmatprep.subr.mxu0 0.0
          %490 = vmatpush1.msra.mxu0 0.0
          %491 = vmatprep.subr.mxu0 0.0
          %492 = vmatpush1.msra.mxu0 0.0
          %493 = vmatprep.subr.mxu0 0.0
          %494 = vmatpush1.msra.mxu0 0.0
          %495 = vmatprep.subr.mxu0 0.0
          %496 = vmatpush1.msra.mxu0 0.0
          %497 = vmatprep.subr.mxu0 0.0
          %498 = vmatpush1.msra.mxu0 0.0
          %499 = vmatprep.subr.mxu0 0.0
          %500 = vmatpush1.msra.mxu0 0.0
          %501 = vmatprep.subr.mxu0 0.0
          %502 = vmatpush1.msra.mxu0 0.0
          %503 = vmatprep.subr.mxu0 0.0
          %504 = vmatpush1.msra.mxu0 0.0
          %505 = vmatprep.subr.mxu0 0.0
          %506 = vmatpush1.msra.mxu0 0.0
          %507 = vmatprep.subr.mxu0 0.0
          %508 = vmatpush1.msra.mxu0 0.0
          %509 = vmatprep.subr.mxu0 0.0
          %510 = vmatpush1.msra.mxu0 0.0
          %511 = vmatprep.subr.mxu0 0.0
          %512 = vmatpush1.msra.mxu0 0.0
          %513 = vmatprep.subr.mxu0 0.0
          %514 = vmatpush1.msra.mxu0 0.0
          %515 = vmatprep.subr.mxu0 0.0
          %516 = vmatpush1.msra.mxu0 0.0
          %517 = vmatprep.subr.mxu0 0.0
          %518 = vmatpush1.msra.mxu0 0.0
          %519 = vmatprep.subr.mxu0 0.0
          %520 = vmatpush1.msra.mxu0 0.0
          %521 = vmatprep.subr.mxu0 0.0
          %522 = vmatpush1.msra.mxu0 0.0
          %523 = vmatprep.subr.mxu0 0.0
          %524 = vmatpush1.msra.mxu0 0.0
          %525 = vmatprep.subr.mxu0 0.0
          %526 = vmatpush1.msra.mxu0 0.0
          %527 = vmatprep.subr.mxu0 0.0
          %528 = vmatpush1.msra.mxu0 0.0
          %529 = vmatprep.subr.mxu0 0.0
          %530 = vmatpush1.msra.mxu0 0.0
          %531 = vmatprep.subr.mxu0 0.0
          %532 = vmatpush1.msra.mxu0 0.0
          %533 = vmatprep.subr.mxu0 0.0
          %534 = vmatpush1.msra.mxu0 0.0
          %535 = vmatprep.subr.mxu0 0.0
          %536 = vmatpush1.msra.mxu0 0.0
          %537 = vmatprep.subr.mxu0 0.0
          %538 = vmatpush1.msra.mxu0 0.0
          %539 = vmatprep.mubr.f32.mxu0 0.0
          %540 = vmatmul.mubr.f32.gmra.mrb[0].mxu0 %v470
          %v541 = vpop.f32.mrb[0].mxu0
          %v542 = vadd.f32 0.0, %v541
          %v543 = vpop.f32.mrb[0].mxu0
          %544 = vmatprep.mubr.f32.mxu0 0.0
          %545 = vmatmul.mubr.f32.gmra.mrb[0].mxu0 %v473
          %v546 = vpop.f32.mrb[0].mxu0
          %v547 = vadd.f32 0.0, %v546
          %v548 = vpop.f32.mrb[0].mxu0
          %549 = vdwg.mxu0
          %v550 = vadd.f32 %v434, %v542
          %v551 = vadd.f32 %v435, %v547
          %vm552 = vcmask 130048
          %553 = vst.msk [vmem:[#allocation2] sm:$0xff] %vm552, %v550
          %554 = vst.msk [vmem:[#allocation2 + $0x8] sm:$0xff] %vm552, %v551
          %v555 = vld [vmem:[#allocation3] sm:$0x1]
          %v557 = vsel %vm468, %v433, 0
          %559 = vmatprep.subr.mxu0 0.0
          %560 = vmatpush1.msra.mxu0 %v432
          %561 = vmatprep.subr.mxu0 0.0
          %562 = vmatpush1.msra.mxu0 0.0
          %563 = vmatprep.subr.mxu0 0.0
          %564 = vmatpush1.msra.mxu0 0.0
          %565 = vmatprep.subr.mxu0 0.0
          %566 = vmatpush1.msra.mxu0 0.0
          %567 = vmatprep.subr.mxu0 0.0
          %568 = vmatpush1.msra.mxu0 0.0
          %569 = vmatprep.subr.mxu0 0.0
          %570 = vmatpush1.msra.mxu0 0.0
          %571 = vmatprep.subr.mxu0 0.0
          %572 = vmatpush1.msra.mxu0 0.0
          %573 = vmatprep.subr.mxu0 0.0
          %574 = vmatpush1.msra.mxu0 0.0
          %575 = vmatprep.subr.mxu0 0.0
          %576 = vmatpush1.msra.mxu0 0.0
          %577 = vmatprep.subr.mxu0 0.0
          %578 = vmatpush1.msra.mxu0 0.0
          %579 = vmatprep.subr.mxu0 0.0
          %580 = vmatpush1.msra.mxu0 0.0
          %581 = vmatprep.subr.mxu0 0.0
          %582 = vmatpush1.msra.mxu0 0.0
          %583 = vmatprep.subr.mxu0 0.0
          %584 = vmatpush1.msra.mxu0 0.0
          %585 = vmatprep.subr.mxu0 0.0
          %586 = vmatpush1.msra.mxu0 0.0
          %587 = vmatprep.subr.mxu0 0.0
          %588 = vmatpush1.msra.mxu0 0.0
          %589 = vmatprep.subr.mxu0 0.0
          %590 = vmatpush1.msra.mxu0 0.0
          %591 = vmatprep.subr.mxu0 0.0
          %592 = vmatpush1.msra.mxu0 0.0
          %593 = vmatprep.subr.mxu0 0.0
          %594 = vmatpush1.msra.mxu0 0.0
          %595 = vmatprep.subr.mxu0 0.0
          %596 = vmatpush1.msra.mxu0 0.0
          %597 = vmatprep.subr.mxu0 0.0
          %598 = vmatpush1.msra.mxu0 0.0
          %599 = vmatprep.subr.mxu0 0.0
          %600 = vmatpush1.msra.mxu0 0.0
          %601 = vmatprep.subr.mxu0 0.0
          %602 = vmatpush1.msra.mxu0 0.0
          %603 = vmatprep.subr.mxu0 0.0
          %604 = vmatpush1.msra.mxu0 0.0
          %605 = vmatprep.subr.mxu0 0.0
          %606 = vmatpush1.msra.mxu0 0.0
          %607 = vmatprep.subr.mxu0 0.0
          %608 = vmatpush1.msra.mxu0 0.0
          %609 = vmatprep.subr.mxu0 0.0
          %610 = vmatpush1.msra.mxu0 0.0
          %611 = vmatprep.subr.mxu0 0.0
          %612 = vmatpush1.msra.mxu0 0.0
          %613 = vmatprep.subr.mxu0 0.0
          %614 = vmatpush1.msra.mxu0 0.0
          %615 = vmatprep.subr.mxu0 0.0
          %616 = vmatpush1.msra.mxu0 0.0
          %617 = vmatprep.subr.mxu0 0.0
          %618 = vmatpush1.msra.mxu0 0.0
          %619 = vmatprep.subr.mxu0 0.0
          %620 = vmatpush1.msra.mxu0 0.0
          %621 = vmatprep.subr.mxu0 0.0
          %622 = vmatpush1.msra.mxu0 0.0
          %623 = vmatprep.mubr.f32.mxu0 0.0
          %624 = vmatmul.mubr.f32.gmra.mrb[0].mxu0 %v557
          %v625 = vpop.f32.mrb[0].mxu0
          %v626 = vadd.f32 0.0, %v625
          %v627 = vpop.f32.mrb[0].mxu0
          %628 = vdwg.mxu0
          %v629 = vadd.f32 %v555, %v626
          %vm630 = vcmask 122880
          %631 = vst.msk [vmem:[#allocation3] sm:$0x1] %vm630, %v629
          %v632 = vld [vmem:[#allocation4] sm:$0x1]
          %633 = vmatprep.subr.mxu0 0.0
          %634 = vmatpush1.msra.mxu0 %v430
          %635 = vmatprep.subr.mxu0 0.0
          %636 = vmatpush1.msra.mxu0 0.0
          %637 = vmatprep.subr.mxu0 0.0
          %638 = vmatpush1.msra.mxu0 0.0
          %639 = vmatprep.subr.mxu0 0.0
          %640 = vmatpush1.msra.mxu0 0.0
          %641 = vmatprep.subr.mxu0 0.0
          %642 = vmatpush1.msra.mxu0 0.0
          %643 = vmatprep.subr.mxu0 0.0
          %644 = vmatpush1.msra.mxu0 0.0
          %645 = vmatprep.subr.mxu0 0.0
          %646 = vmatpush1.msra.mxu0 0.0
          %647 = vmatprep.subr.mxu0 0.0
          %648 = vmatpush1.msra.mxu0 0.0
          %649 = vmatprep.subr.mxu0 0.0
          %650 = vmatpush1.msra.mxu0 0.0
          %651 = vmatprep.subr.mxu0 0.0
          %652 = vmatpush1.msra.mxu0 0.0
          %653 = vmatprep.subr.mxu0 0.0
          %654 = vmatpush1.msra.mxu0 0.0
          %655 = vmatprep.subr.mxu0 0.0
          %656 = vmatpush1.msra.mxu0 0.0
          %657 = vmatprep.subr.mxu0 0.0
          %658 = vmatpush1.msra.mxu0 0.0
          %659 = vmatprep.subr.mxu0 0.0
          %660 = vmatpush1.msra.mxu0 0.0
          %661 = vmatprep.subr.mxu0 0.0
          %662 = vmatpush1.msra.mxu0 0.0
          %663 = vmatprep.subr.mxu0 0.0
          %664 = vmatpush1.msra.mxu0 0.0
          %665 = vmatprep.subr.mxu0 0.0
          %666 = vmatpush1.msra.mxu0 0.0
          %667 = vmatprep.subr.mxu0 0.0
          %668 = vmatpush1.msra.mxu0 0.0
          %669 = vmatprep.subr.mxu0 0.0
          %670 = vmatpush1.msra.mxu0 0.0
          %671 = vmatprep.subr.mxu0 0.0
          %672 = vmatpush1.msra.mxu0 0.0
          %673 = vmatprep.subr.mxu0 0.0
          %674 = vmatpush1.msra.mxu0 0.0
          %675 = vmatprep.subr.mxu0 0.0
          %676 = vmatpush1.msra.mxu0 0.0
          %677 = vmatprep.subr.mxu0 0.0
          %678 = vmatpush1.msra.mxu0 0.0
          %679 = vmatprep.subr.mxu0 0.0
          %680 = vmatpush1.msra.mxu0 0.0
          %681 = vmatprep.subr.mxu0 0.0
          %682 = vmatpush1.msra.mxu0 0.0
          %683 = vmatprep.subr.mxu0 0.0
          %684 = vmatpush1.msra.mxu0 0.0
          %685 = vmatprep.subr.mxu0 0.0
          %686 = vmatpush1.msra.mxu0 0.0
          %687 = vmatprep.subr.mxu0 0.0
          %688 = vmatpush1.msra.mxu0 0.0
          %689 = vmatprep.subr.mxu0 0.0
          %690 = vmatpush1.msra.mxu0 0.0
          %691 = vmatprep.subr.mxu0 0.0
          %692 = vmatpush1.msra.mxu0 0.0
          %693 = vmatprep.subr.mxu0 0.0
          %694 = vmatpush1.msra.mxu0 0.0
          %695 = vmatprep.subr.mxu0 0.0
          %696 = vmatpush1.msra.mxu0 0.0
          %697 = vmatprep.mubr.f32.mxu0 0.0
          %698 = vmatmul.mubr.f32.gmra.mrb[0].mxu0 %v557
          %v699 = vpop.f32.mrb[0].mxu0
          %v700 = vadd.f32 0.0, %v699
          %v701 = vpop.f32.mrb[0].mxu0
          %702 = vdwg.mxu0
          %v703 = vadd.f32 %v632, %v700
          %704 = vst.msk [vmem:[#allocation4] sm:$0x1] %vm630, %v703
          %v705 = vld [vmem:[%s1] sm:$0xff]
          %v706 = vld [vmem:[%s1 + $0x8] sm:$0xff]
          %v707 = vld [vmem:[#allocation3] sm:$0x1]
          %v708 = vmul.f32 %v707, 0.05
          %v709 = vld [vmem:[#allocation4] sm:$0x1]
          %v710 = vsub.f32 %v709, %v707
          %v711 = vmul.f32 %v710, 0.05
          %v713 = vsel %vm552, %v708, 0
          %715 = vmatprep.subr.mxu0 0.0
          %716 = vmatpush1.msra.mxu0 %v705
          %717 = vmatprep.subr.mxu0 0.0
          %718 = vmatpush1.msra.mxu0 %v706
          %719 = vmatprep.subr.mxu0 0.0
          %720 = vmatpush1.msra.mxu0 0.0
          %721 = vmatprep.subr.mxu0 0.0
          %722 = vmatpush1.msra.mxu0 0.0
          %723 = vmatprep.subr.mxu0 0.0
          %724 = vmatpush1.msra.mxu0 0.0
          %725 = vmatprep.subr.mxu0 0.0
          %726 = vmatpush1.msra.mxu0 0.0
          %727 = vmatprep.subr.mxu0 0.0
          %728 = vmatpush1.msra.mxu0 0.0
          %729 = vmatprep.subr.mxu0 0.0
          %730 = vmatpush1.msra.mxu0 0.0
          %731 = vmatprep.subr.mxu0 0.0
          %732 = vmatpush1.msra.mxu0 0.0
          %733 = vmatprep.subr.mxu0 0.0
          %734 = vmatpush1.msra.mxu0 0.0
          %735 = vmatprep.subr.mxu0 0.0
          %736 = vmatpush1.msra.mxu0 0.0
          %737 = vmatprep.subr.mxu0 0.0
          %738 = vmatpush1.msra.mxu0 0.0
          %739 = vmatprep.subr.mxu0 0.0
          %740 = vmatpush1.msra.mxu0 0.0
          %741 = vmatprep.subr.mxu0 0.0
          %742 = vmatpush1.msra.mxu0 0.0
          %743 = vmatprep.subr.mxu0 0.0
          %744 = vmatpush1.msra.mxu0 0.0
          %745 = vmatprep.subr.mxu0 0.0
          %746 = vmatpush1.msra.mxu0 0.0
          %747 = vmatprep.subr.mxu0 0.0
          %748 = vmatpush1.msra.mxu0 0.0
          %749 = vmatprep.subr.mxu0 0.0
          %750 = vmatpush1.msra.mxu0 0.0
          %751 = vmatprep.subr.mxu0 0.0
          %752 = vmatpush1.msra.mxu0 0.0
          %753 = vmatprep.subr.mxu0 0.0
          %754 = vmatpush1.msra.mxu0 0.0
          %755 = vmatprep.subr.mxu0 0.0
          %756 = vmatpush1.msra.mxu0 0.0
          %757 = vmatprep.subr.mxu0 0.0
          %758 = vmatpush1.msra.mxu0 0.0
          %759 = vmatprep.subr.mxu0 0.0
          %760 = vmatpush1.msra.mxu0 0.0
          %761 = vmatprep.subr.mxu0 0.0
          %762 = vmatpush1.msra.mxu0 0.0
          %763 = vmatprep.subr.mxu0 0.0
          %764 = vmatpush1.msra.mxu0 0.0
          %765 = vmatprep.subr.mxu0 0.0
          %766 = vmatpush1.msra.mxu0 0.0
          %767 = vmatprep.subr.mxu0 0.0
          %768 = vmatpush1.msra.mxu0 0.0
          %769 = vmatprep.subr.mxu0 0.0
          %770 = vmatpush1.msra.mxu0 0.0
          %771 = vmatprep.subr.mxu0 0.0
          %772 = vmatpush1.msra.mxu0 0.0
          %773 = vmatprep.subr.mxu0 0.0
          %774 = vmatpush1.msra.mxu0 0.0
          %775 = vmatprep.subr.mxu0 0.0
          %776 = vmatpush1.msra.mxu0 0.0
          %777 = vmatprep.subr.mxu0 0.0
          %778 = vmatpush1.msra.mxu0 0.0
          %779 = vmatprep.mubr.f32.mxu0 0.0
          %780 = vmatmul.mubr.f32.gmra.mrb[0].mxu0 %v713
          %v781 = vpop.f32.mrb[0].mxu0
          %v782 = vadd.f32 0.0, %v781
          %v783 = vpop.f32.mrb[0].mxu0
          %784 = vdwg.mxu0
          %v786 = vsel %vm552, %v711, 0
          %788 = vmatprep.subr.mxu0 0.0
          %789 = vmatpush1.msra.mxu0 %v705
          %790 = vmatprep.subr.mxu0 0.0
          %791 = vmatpush1.msra.mxu0 %v706
          %792 = vmatprep.subr.mxu0 0.0
          %793 = vmatpush1.msra.mxu0 0.0
          %794 = vmatprep.subr.mxu0 0.0
          %795 = vmatpush1.msra.mxu0 0.0
          %796 = vmatprep.subr.mxu0 0.0
          %797 = vmatpush1.msra.mxu0 0.0
          %798 = vmatprep.subr.mxu0 0.0
          %799 = vmatpush1.msra.mxu0 0.0
          %800 = vmatprep.subr.mxu0 0.0
          %801 = vmatpush1.msra.mxu0 0.0
          %802 = vmatprep.subr.mxu0 0.0
          %803 = vmatpush1.msra.mxu0 0.0
          %804 = vmatprep.subr.mxu0 0.0
          %805 = vmatpush1.msra.mxu0 0.0
          %806 = vmatprep.subr.mxu0 0.0
          %807 = vmatpush1.msra.mxu0 0.0
          %808 = vmatprep.subr.mxu0 0.0
          %809 = vmatpush1.msra.mxu0 0.0
          %810 = vmatprep.subr.mxu0 0.0
          %811 = vmatpush1.msra.mxu0 0.0
          %812 = vmatprep.subr.mxu0 0.0
          %813 = vmatpush1.msra.mxu0 0.0
          %814 = vmatprep.subr.mxu0 0.0
          %815 = vmatpush1.msra.mxu0 0.0
          %816 = vmatprep.subr.mxu0 0.0
          %817 = vmatpush1.msra.mxu0 0.0
          %818 = vmatprep.subr.mxu0 0.0
          %819 = vmatpush1.msra.mxu0 0.0
          %820 = vmatprep.subr.mxu0 0.0
          %821 = vmatpush1.msra.mxu0 0.0
          %822 = vmatprep.subr.mxu0 0.0
          %823 = vmatpush1.msra.mxu0 0.0
          %824 = vmatprep.subr.mxu0 0.0
          %825 = vmatpush1.msra.mxu0 0.0
          %826 = vmatprep.subr.mxu0 0.0
          %827 = vmatpush1.msra.mxu0 0.0
          %828 = vmatprep.subr.mxu0 0.0
          %829 = vmatpush1.msra.mxu0 0.0
          %830 = vmatprep.subr.mxu0 0.0
          %831 = vmatpush1.msra.mxu0 0.0
          %832 = vmatprep.subr.mxu0 0.0
          %833 = vmatpush1.msra.mxu0 0.0
          %834 = vmatprep.subr.mxu0 0.0
          %835 = vmatpush1.msra.mxu0 0.0
          %836 = vmatprep.subr.mxu0 0.0
          %837 = vmatpush1.msra.mxu0 0.0
          %838 = vmatprep.subr.mxu0 0.0
          %839 = vmatpush1.msra.mxu0 0.0
          %840 = vmatprep.subr.mxu0 0.0
          %841 = vmatpush1.msra.mxu0 0.0
          %842 = vmatprep.subr.mxu0 0.0
          %843 = vmatpush1.msra.mxu0 0.0
          %844 = vmatprep.subr.mxu0 0.0
          %845 = vmatpush1.msra.mxu0 0.0
          %846 = vmatprep.subr.mxu0 0.0
          %847 = vmatpush1.msra.mxu0 0.0
          %848 = vmatprep.subr.mxu0 0.0
          %849 = vmatpush1.msra.mxu0 0.0
          %850 = vmatprep.subr.mxu0 0.0
          %851 = vmatpush1.msra.mxu0 0.0
          %852 = vmatprep.mubr.f32.mxu0 0.0
          %853 = vmatmul.mubr.f32.gmra.mrb[0].mxu0 %v786
          %v854 = vpop.f32.mrb[0].mxu0
          %v855 = vadd.f32 0.0, %v854
          %v856 = vpop.f32.mrb[0].mxu0
          %857 = vdwg.mxu0
          %v858 = vld [vmem:[#allocation2] sm:$0xff]
          %v859 = vld [vmem:[#allocation2 + $0x8] sm:$0xff]
          %v860 = vmul.f32 %v858, 0.05
          %v861 = vmul.f32 %v859, 0.05
          %v863 = vsel %vm552, %v860, 0
          %v866 = vsel %vm552, %v861, 0
          %868 = vmatprep.subr.mxu0 0.0
          %869 = vmatpush1.msra.mxu0 %v705
          %870 = vmatprep.subr.mxu0 0.0
          %871 = vmatpush1.msra.mxu0 %v706
          %872 = vmatprep.subr.mxu0 0.0
          %873 = vmatpush1.msra.mxu0 0.0
          %874 = vmatprep.subr.mxu0 0.0
          %875 = vmatpush1.msra.mxu0 0.0
          %876 = vmatprep.subr.mxu0 0.0
          %877 = vmatpush1.msra.mxu0 0.0
          %878 = vmatprep.subr.mxu0 0.0
          %879 = vmatpush1.msra.mxu0 0.0
          %880 = vmatprep.subr.mxu0 0.0
          %881 = vmatpush1.msra.mxu0 0.0
          %882 = vmatprep.subr.mxu0 0.0
          %883 = vmatpush1.msra.mxu0 0.0
          %884 = vmatprep.subr.mxu0 0.0
          %885 = vmatpush1.msra.mxu0 0.0
          %886 = vmatprep.subr.mxu0 0.0
          %887 = vmatpush1.msra.mxu0 0.0
          %888 = vmatprep.subr.mxu0 0.0
          %889 = vmatpush1.msra.mxu0 0.0
          %890 = vmatprep.subr.mxu0 0.0
          %891 = vmatpush1.msra.mxu0 0.0
          %892 = vmatprep.subr.mxu0 0.0
          %893 = vmatpush1.msra.mxu0 0.0
          %894 = vmatprep.subr.mxu0 0.0
          %895 = vmatpush1.msra.mxu0 0.0
          %896 = vmatprep.subr.mxu0 0.0
          %897 = vmatpush1.msra.mxu0 0.0
          %898 = vmatprep.subr.mxu0 0.0
          %899 = vmatpush1.msra.mxu0 0.0
          %900 = vmatprep.subr.mxu0 0.0
          %901 = vmatpush1.msra.mxu0 0.0
          %902 = vmatprep.subr.mxu0 0.0
          %903 = vmatpush1.msra.mxu0 0.0
          %904 = vmatprep.subr.mxu0 0.0
          %905 = vmatpush1.msra.mxu0 0.0
          %906 = vmatprep.subr.mxu0 0.0
          %907 = vmatpush1.msra.mxu0 0.0
          %908 = vmatprep.subr.mxu0 0.0
          %909 = vmatpush1.msra.mxu0 0.0
          %910 = vmatprep.subr.mxu0 0.0
          %911 = vmatpush1.msra.mxu0 0.0
          %912 = vmatprep.subr.mxu0 0.0
          %913 = vmatpush1.msra.mxu0 0.0
          %914 = vmatprep.subr.mxu0 0.0
          %915 = vmatpush1.msra.mxu0 0.0
          %916 = vmatprep.subr.mxu0 0.0
          %917 = vmatpush1.msra.mxu0 0.0
          %918 = vmatprep.subr.mxu0 0.0
          %919 = vmatpush1.msra.mxu0 0.0
          %920 = vmatprep.subr.mxu0 0.0
          %921 = vmatpush1.msra.mxu0 0.0
          %922 = vmatprep.subr.mxu0 0.0
          %923 = vmatpush1.msra.mxu0 0.0
          %924 = vmatprep.subr.mxu0 0.0
          %925 = vmatpush1.msra.mxu0 0.0
          %926 = vmatprep.subr.mxu0 0.0
          %927 = vmatpush1.msra.mxu0 0.0
          %928 = vmatprep.subr.mxu0 0.0
          %929 = vmatpush1.msra.mxu0 0.0
          %930 = vmatprep.subr.mxu0 0.0
          %931 = vmatpush1.msra.mxu0 0.0
          %932 = vmatprep.mubr.f32.mxu0 0.0
          %933 = vmatmul.mubr.f32.gmra.mrb[0].mxu0 %v863
          %v934 = vpop.f32.mrb[0].mxu0
          %v935 = vadd.f32 0.0, %v934
          %v936 = vpop.f32.mrb[0].mxu0
          %937 = vmatprep.mubr.f32.mxu0 0.0
          %938 = vmatmul.mubr.f32.gmra.mrb[0].mxu0 %v866
          %v939 = vpop.f32.mrb[0].mxu0
          %v940 = vadd.f32 0.0, %v939
          %v941 = vpop.f32.mrb[0].mxu0
          %942 = vdwg.mxu0
          %945 = vrot.lane.b32.xlu0 %v935, 114
          %v946 = vpop.permute.xlu0 %945
          %947 = vrot.lane.b32.xlu0 %v940, 114
          %v948 = vpop.permute.xlu0 %947
          %v951 = vmul.f32 %v705, %v946
          %v952 = vmul.f32 %v706, %v948
          %vm953 = vcmask 113664
          %v954 = vsel %vm953, %v951, 0.0
          %v955 = vsel %vm953, %v952, 0.0
          %v956 = vadd.f32 %v954, %v955
          %v957 = vrot.slane %v956, 4
          %v958 = vadd.f32 %v956, %v957
          %v959 = vrot.slane %v958, 2
          %v960 = vadd.f32 %v958, %v959
          %v961 = vrot.slane %v960, 1
          %v962 = vadd.f32 %v960, %v961
          %v963 = vlaneseq
          %v964 = vand.u32 %v963, 127
          %vm965 = vcmp.lt.s32.totalorder %v964, 10
          %v966 = vsel %vm965, 1.0, -1.0
          %968 = vrot.lane.b32.xlu0 %v782, 114
          %v969 = vpop.permute.xlu0 %968
          %v971 = vmul.f32 %v782, %v969
          %v972 = vsub.f32 %v971, %v962
          %v973 = vmax.f32 %v972, 0.0
          %v974 = vmul.f32 %v855, %v969
          %v975 = vsub.f32 %v974, %v962
          %v976 = vmul.f32 %v966, %v975
          %v977 = vmax.f32 %v976, 0.0
          %979 = vrot.lane.b32.xlu0 %v855, 114
          %v980 = vpop.permute.xlu0 %979
          %v982 = vmul.f32 %v782, %v980
          %v983 = vsub.f32 %v982, %v962
          %v984 = vmul.f32 %v966, %v983
          %v985 = vmax.f32 %v984, 0.0
          %v986 = vadd.f32 %v973, %v977
          %v987 = vadd.f32 %v986, %v985
          %vm988 = vcmask 106496
          %v989 = vsel %vm988, %v987, 0.0
          %990 = vadd.xlane.f32.xlu0 %v989
          %v991 = vpop.xlane.xlu0 %990
          %vm992 = vcmask 0
          %993 = vst.msk [vmem:[#allocation6] sm:$0x1] %vm992, %v991
        $region40: #{tpu_custom_call.1} parent=27 // pred_fallthru
          _
        // Predicated region
        $region41: #{tpu_custom_call.1} parent=27 // pred_check
          %p994 = pneg %p74
        $region42: #{tpu_custom_call.1} parent=27 // pred_check_branch
          %996 = sbr.rel (%p994) target = $region44
        $region43: #{tpu_custom_call.1} parent=27 // pred_region
          %s998 = ssub.s32 16, 16
          %999 = vsyncadd [#allocation7], %s998
          %s1001 = sshll.u32 [#allocation6], 4
          %s1002 = int_to_ptr.vmem [resolvable:$true] %s1001
          %1004 = dma.vmem_to_hbm [thread:$0]  %s1002, 16, %s2, [#allocation7]
        $region44: #{tpu_custom_call.1} parent=27 // pred_fallthru
          _
        // Predicated region
        $region45: #{tpu_custom_call.1} parent=27 // pred_check
          %p1005 = pneg %p74
        $region46: #{tpu_custom_call.1} parent=27 // pred_check_branch
          %1007 = sbr.rel (%p1005) target = $region48
        $region47: #{tpu_custom_call.1} parent=27 // pred_region
          %1008 = dma.done [#allocation7], 16
        $region48: #{tpu_custom_call.1} parent=27 // pred_fallthru
          _
      $region28: #{tpu_custom_call.1} parent=5 // pred_fallthru
        _
      %p1009 = scmp.le.s32.totalorder 2, %s9
      // Predicated region
      $region49: #{tpu_custom_call.1} parent=5 // pred_check
        %p1010 = pneg %p1009
      $region50: #{tpu_custom_call.1} parent=5 // pred_check_branch
        %1012 = sbr.rel (%p1010) target = $region52
      $region51: #{tpu_custom_call.1} parent=5 // pred_region
        %s1013 = ssub.s32 %s9, 2
      $region52: #{tpu_custom_call.1} parent=5 // pred_fallthru
        _
    $region6: #{tpu_custom_call.1} parent=1 // loop_footer
      %s13 = sadd.s32 1, %s9
    $region7: #{tpu_custom_call.1} parent=1 // loop_footer_branch
      %8 = sbr.rel target = $region3
    $region8: #{tpu_custom_call.1} parent=1 // loop_exit
      _
    %1014 = vsyncpa [#allocation7], 1
    %s1015 = scalar_lea.sflag [#allocation7], 1
    %1016 = vsyncpa %s1015, 1

</llo_original>
